<compile_context>
chip_gen: v7x
topology: tpu7x:2x2x1
jax: 0.10.0
libtpu: 0.0.40
codegen_flags: <defaults>
</compile_context>

<pallas_src>
import jax
import jax.numpy as jnp
from jax.experimental import pallas as pl
from jax.experimental.pallas import tpu as pltpu

# True model sizes (from nn.Linear(2,3) and nn.Linear(3,1)).
IN_F, HID_F, OUT_F = 2, 3, 1

# Rows per grid step once the batch is large enough to be worth tiling.
MAX_TILE = 1024


def simple_nn_kernel(p_ref, x_ref, o_ref):
    """p_ref: (16,) f32 in SMEM (packed scalars); x_ref: (TB, 2); o_ref: (TB, 1).

    Packed layout: p[0:3]=W1.T row0 (in0->hid), p[3:6]=W1.T row1 (in1->hid),
                   p[6:9]=b1, p[9:12]=W2 row (hid->out), p[12]=b2.
    """
    x0 = x_ref[:, 0:1]                                   # (TB, 1)
    x1 = x_ref[:, 1:2]                                   # (TB, 1)
    # fc1 + ReLU: three hidden units, pure VPU scalar-broadcast multiply-adds.
    h0 = jnp.maximum(x0 * p_ref[0] + x1 * p_ref[3] + p_ref[6], 0.0)
    h1 = jnp.maximum(x0 * p_ref[1] + x1 * p_ref[4] + p_ref[7], 0.0)
    h2 = jnp.maximum(x0 * p_ref[2] + x1 * p_ref[5] + p_ref[8], 0.0)
    # fc2: 3-term reduction into the single output lane.
    y = h0 * p_ref[9] + h1 * p_ref[10] + h2 * p_ref[11] + p_ref[12]
    o_ref[...] = y.astype(o_ref.dtype)


def prepare_params(w1, b1, w2, b2):
    """Pack the 13 network scalars into one (16,) f32 operand (done once).

    PyTorch layout in: w1 (3,2)[hid,in], b1 (3,), w2 (1,3)[out,hid], b2 (1,).
    """
    p = jnp.zeros((16,), jnp.float32)
    p = p.at[0:3].set(w1[:, 0].astype(jnp.float32))    # input feature 0 -> hid
    p = p.at[3:6].set(w1[:, 1].astype(jnp.float32))    # input feature 1 -> hid
    p = p.at[6:9].set(b1.astype(jnp.float32))
    p = p.at[9:12].set(w2[0, :].astype(jnp.float32))   # hid -> out
    p = p.at[12].set(b2[0].astype(jnp.float32))
    return p


@jax.jit
def simple_nn_forward(x, params):
    """x: (B, 2); params: (16,) from prepare_params. Returns (B, 1) float32."""
    B = x.shape[0]
    x = x.astype(jnp.float32)

    pb8 = ((B + 7) // 8) * 8                 # sublane-aligned row count
    if pb8 <= MAX_TILE:
        tb, pb = pb8, pb8                    # one block, grid of 1
    else:
        tb = MAX_TILE                        # tiled + pipelined large batch
        pb = ((B + tb - 1) // tb) * tb

    x_p = x if pb == B else jnp.zeros((pb, IN_F), jnp.float32).at[:B].set(x)

    out = pl.pallas_call(
        simple_nn_kernel,
        out_shape=jax.ShapeDtypeStruct((pb, OUT_F), jnp.float32),
        grid=(pb // tb,),
        in_specs=[
            # Packed weights/biases: whole (tiny) array resident in SMEM.
            pl.BlockSpec(memory_space=pltpu.MemorySpace.SMEM),
            # x at its true width 2 (block last dim == full array dim -> legal).
            pl.BlockSpec((tb, IN_F), lambda i: (i, 0)),
        ],
        # True-width output: only the real column is written back.
        out_specs=pl.BlockSpec((tb, OUT_F), lambda i: (i, 0)),
        compiler_params=pltpu.CompilerParams(
            dimension_semantics=("parallel",)),   # v7x: shard batch over 2 TCs
    )(params, x_p)

    return out if pb == B else out[:B]


def init_params(key):
    """Deterministic init mimicking PyTorch nn.Linear defaults
    (U[-1/sqrt(fan_in), 1/sqrt(fan_in)]), in PyTorch layout."""
    k1, k2, k3, k4 = jax.random.split(key, 4)
    lim1 = 1.0 / jnp.sqrt(jnp.float32(IN_F))
    lim2 = 1.0 / jnp.sqrt(jnp.float32(HID_F))
    w1 = jax.random.uniform(k1, (HID_F, IN_F), jnp.float32, -lim1, lim1)
    b1 = jax.random.uniform(k2, (HID_F,), jnp.float32, -lim1, lim1)
    w2 = jax.random.uniform(k3, (OUT_F, HID_F), jnp.float32, -lim2, lim2)
    b2 = jax.random.uniform(k4, (OUT_F,), jnp.float32, -lim2, lim2)
    return w1, b1, w2, b2


if __name__ == "__main__":
    key = jax.random.PRNGKey(0)
    kx, kp = jax.random.split(key)

    batch = 4
    x = jax.random.normal(kx, (batch, IN_F), jnp.float32)
    w1, b1, w2, b2 = init_params(kp)

    # Pack parameters once; the per-call wrapper touches only x.
    params = prepare_params(w1, b1, w2, b2)

    out = simple_nn_forward(x, params)
    out = jax.block_until_ready(out)

    # Pure-JAX reference of the same forward semantics (PyTorch layout).
    ref = jnp.maximum(x @ w1.T + b1, 0.0) @ w2.T + b2
    assert out.shape == (batch, OUT_F)
    assert jnp.allclose(out, ref, atol=1e-5, rtol=1e-5)

    print("KERNEL_OK")
</pallas_src>

<mosaic_0001>
module attributes {stable_mosaic.version = 11 : i64} {
  func.func @simple_nn_kernel(%arg0: i32, %arg1: memref<16xf32, #tpu.memory_space<smem>>, %arg2: memref<8x2xf32, #tpu.memory_space<vmem>>, %arg3: memref<8x1xf32, #tpu.memory_space<vmem>>) attributes {dimension_semantics = [#tpu.dimension_semantics<parallel>], iteration_bounds = array<i64: 1>, scalar_prefetch = 0 : i64, scratch_operands = 0 : i64, tpu.core_type = #tpu.core_type<tc>, window_params = [{transform_indices = @transform_0, window_bounds = array<i64: 16>}, {transform_indices = @transform_1, window_bounds = array<i64: 8, 2>}, {transform_indices = @transform_2, window_bounds = array<i64: 8, 1>}]} {
    %c0 = arith.constant 0 : index
    %c0_0 = arith.constant 0 : index
    %0 = vector.load %arg2[%c0, %c0_0] : memref<8x2xf32, #tpu.memory_space<vmem>>, vector<8x1xf32>
    %c0_1 = arith.constant 0 : index
    %c1 = arith.constant 1 : index
    %1 = vector.load %arg2[%c0_1, %c1] : memref<8x2xf32, #tpu.memory_space<vmem>>, vector<8x1xf32>
    %c0_2 = arith.constant 0 : index
    %2 = memref.load %arg1[%c0_2] : memref<16xf32, #tpu.memory_space<smem>>
    %3 = vector.broadcast %2 : f32 to vector<8x1xf32>
    %4 = arith.mulf %0, %3 : vector<8x1xf32>
    %c3 = arith.constant 3 : index
    %5 = memref.load %arg1[%c3] : memref<16xf32, #tpu.memory_space<smem>>
    %6 = vector.broadcast %5 : f32 to vector<8x1xf32>
    %7 = arith.mulf %1, %6 : vector<8x1xf32>
    %8 = arith.addf %4, %7 : vector<8x1xf32>
    %c6 = arith.constant 6 : index
    %9 = memref.load %arg1[%c6] : memref<16xf32, #tpu.memory_space<smem>>
    %10 = vector.broadcast %9 : f32 to vector<8x1xf32>
    %11 = arith.addf %8, %10 : vector<8x1xf32>
    %cst = arith.constant 0.000000e+00 : f32
    %12 = vector.broadcast %cst : f32 to vector<8x1xf32>
    %13 = arith.maximumf %11, %12 : vector<8x1xf32>
    %c1_3 = arith.constant 1 : index
    %14 = memref.load %arg1[%c1_3] : memref<16xf32, #tpu.memory_space<smem>>
    %15 = vector.broadcast %14 : f32 to vector<8x1xf32>
    %16 = arith.mulf %0, %15 : vector<8x1xf32>
    %c4 = arith.constant 4 : index
    %17 = memref.load %arg1[%c4] : memref<16xf32, #tpu.memory_space<smem>>
    %18 = vector.broadcast %17 : f32 to vector<8x1xf32>
    %19 = arith.mulf %1, %18 : vector<8x1xf32>
    %20 = arith.addf %16, %19 : vector<8x1xf32>
    %c7 = arith.constant 7 : index
    %21 = memref.load %arg1[%c7] : memref<16xf32, #tpu.memory_space<smem>>
    %22 = vector.broadcast %21 : f32 to vector<8x1xf32>
    %23 = arith.addf %20, %22 : vector<8x1xf32>
    %cst_4 = arith.constant 0.000000e+00 : f32
    %24 = vector.broadcast %cst_4 : f32 to vector<8x1xf32>
    %25 = arith.maximumf %23, %24 : vector<8x1xf32>
    %c2 = arith.constant 2 : index
    %26 = memref.load %arg1[%c2] : memref<16xf32, #tpu.memory_space<smem>>
    %27 = vector.broadcast %26 : f32 to vector<8x1xf32>
    %28 = arith.mulf %0, %27 : vector<8x1xf32>
    %c5 = arith.constant 5 : index
    %29 = memref.load %arg1[%c5] : memref<16xf32, #tpu.memory_space<smem>>
    %30 = vector.broadcast %29 : f32 to vector<8x1xf32>
    %31 = arith.mulf %1, %30 : vector<8x1xf32>
    %32 = arith.addf %28, %31 : vector<8x1xf32>
    %c8 = arith.constant 8 : index
    %33 = memref.load %arg1[%c8] : memref<16xf32, #tpu.memory_space<smem>>
    %34 = vector.broadcast %33 : f32 to vector<8x1xf32>
    %35 = arith.addf %32, %34 : vector<8x1xf32>
    %cst_5 = arith.constant 0.000000e+00 : f32
    %36 = vector.broadcast %cst_5 : f32 to vector<8x1xf32>
    %37 = arith.maximumf %35, %36 : vector<8x1xf32>
    %c9 = arith.constant 9 : index
    %38 = memref.load %arg1[%c9] : memref<16xf32, #tpu.memory_space<smem>>
    %39 = vector.broadcast %38 : f32 to vector<8x1xf32>
    %40 = arith.mulf %13, %39 : vector<8x1xf32>
    %c10 = arith.constant 10 : index
    %41 = memref.load %arg1[%c10] : memref<16xf32, #tpu.memory_space<smem>>
    %42 = vector.broadcast %41 : f32 to vector<8x1xf32>
    %43 = arith.mulf %25, %42 : vector<8x1xf32>
    %44 = arith.addf %40, %43 : vector<8x1xf32>
    %c11 = arith.constant 11 : index
    %45 = memref.load %arg1[%c11] : memref<16xf32, #tpu.memory_space<smem>>
    %46 = vector.broadcast %45 : f32 to vector<8x1xf32>
    %47 = arith.mulf %37, %46 : vector<8x1xf32>
    %48 = arith.addf %44, %47 : vector<8x1xf32>
    %c12 = arith.constant 12 : index
    %49 = memref.load %arg1[%c12] : memref<16xf32, #tpu.memory_space<smem>>
    %50 = vector.broadcast %49 : f32 to vector<8x1xf32>
    %51 = arith.addf %48, %50 : vector<8x1xf32>
    %c0_6 = arith.constant 0 : index
    %c0_7 = arith.constant 0 : index
    %52 = vector.load %arg3[%c0_6, %c0_7] : memref<8x1xf32, #tpu.memory_space<vmem>>, vector<8x1xf32>
    tpu.vector_store %arg3[%c0_6, %c0_7], %51 {strides = array<i32>} : memref<8x1xf32, #tpu.memory_space<vmem>>, vector<8x1xf32>,
    return
  }
  func.func @transform_0(%arg0: i32) -> i32 {
    %c0_i32 = arith.constant 0 : i32
    %c0_i32_0 = arith.constant 0 : i32
    return %c0_i32 : i32
  }
  func.func @transform_1(%arg0: i32) -> (i32, i32) {
    %c0_i32 = arith.constant 0 : i32
    %c0_i32_0 = arith.constant 0 : i32
    return %arg0, %c0_i32 : i32, i32
  }
  func.func @transform_2(%arg0: i32) -> (i32, i32) {
    %c0_i32 = arith.constant 0 : i32
    %c0_i32_0 = arith.constant 0 : i32
    return %arg0, %c0_i32 : i32, i32
  }
}

</mosaic_0001>

<llo_original>
// kernel: simple_nn_forward.1
$region0: #{simple_nn_forward.1}
  #allocation0 [shape = 'u32[]', space=smem, size = 0x4, offset = 0x4, fixed_abs, tag = 'smem constant byte address 0x4 - core index']
  #allocation1 [shape = 'u32[144,128]{1,0:T(1,128)}', space=vmem, size = 0x12000, scoped, tag = 'internal scratch']
  %s0 = inlined_call_operand.vmem [shape: f32[16], index: 0, kind: input, shape index: {}]
  %s1 = inlined_call_operand.vmem [shape: f32[8,2], index: 1, kind: input, shape index: {}]
  %s2 = inlined_call_operand.vmem [shape: f32[8,1], index: 2, kind: output, shape index: {}]
  %s3 = sld [smem:[#allocation0]]
  $region22: #{simple_nn_forward.1} parent=0
    _
  %s5 = ssub.s32 1, %s3
  %s6 = scalar_select 0, %s5, %s3
  $region1: #{simple_nn_forward.1} parent=0
    #allocation2 [shape = 'u8[512]{0}', space=smem, size = 0x200, scoped, tag = 'input window, operand 0, single buffered']
    #allocation3 [shape = 's32[1]{0}', space=sflag, size = 0x4, scoped, tag = 'scoped memory for simple_nn_forward.1']
    %7 = vsyncpa [#allocation3], 0
    // Predicated region
    $region2: #{simple_nn_forward.1} parent=1 // pred_check
      _
    $region3: #{simple_nn_forward.1} parent=1 // pred_check_branch
      %9 = sbr.rel (0) target = $region5
    $region4: #{simple_nn_forward.1} parent=1 // pred_region
      %s11 = ssub.s32 16, 16
      %12 = vsyncadd [#allocation3], %s11
      %s14 = sshll.u32 %s0, 4
      %s15 = int_to_ptr.vmem [resolvable:$true] %s14
      %17 = dma.vmem_to_smem %s15, 16, [#allocation2], [#allocation3]
    $region5: #{simple_nn_forward.1} parent=1 // pred_fallthru
      _
    // Predicated region
    $region6: #{simple_nn_forward.1} parent=1 // pred_check
      _
    $region7: #{simple_nn_forward.1} parent=1 // pred_check_branch
      %19 = sbr.rel (0) target = $region9
    $region8: #{simple_nn_forward.1} parent=1 // pred_region
      _
    $region9: #{simple_nn_forward.1} parent=1 // pred_fallthru
      _
    // Predicated region
    $region10: #{simple_nn_forward.1} parent=1 // pred_check
      _
    $region11: #{simple_nn_forward.1} parent=1 // pred_check_branch
      %21 = sbr.rel (0) target = $region13
    $region12: #{simple_nn_forward.1} parent=1 // pred_region
      %22 = dma.done [#allocation3], 16
    $region13: #{simple_nn_forward.1} parent=1 // pred_fallthru
      _
    %23 = sfence
    %v24 = vld [vmem:[%s1] sm:$0xff]
    %s25 = sld [smem:[#allocation2]]
    %v26 = vstv %s25
    %v27 = vmul.f32 %v24, %v26
    %s28 = sld [smem:[#allocation2 + $0x3]]
    %v29 = vstv %s28
    %v30 = vmul.f32 %v24, %v29
    %32 = vrot.lane.b32.xlu0 %v30, 127
    %v33 = vpop.permute.xlu0 %32
    %v35 = vadd.f32 %v27, %v33
    %s36 = sld [smem:[#allocation2 + $0x6]]
    %v37 = vstv %s36
    %v38 = vadd.f32 %v35, %v37
    %v39 = vmax.f32 %v38, 0.0
    %s40 = sld [smem:[#allocation2 + $0x1]]
    %v41 = vstv %s40
    %v42 = vmul.f32 %v24, %v41
    %s43 = sld [smem:[#allocation2 + $0x4]]
    %v44 = vstv %s43
    %v45 = vmul.f32 %v24, %v44
    %47 = vrot.lane.b32.xlu0 %v45, 127
    %v48 = vpop.permute.xlu0 %47
    %v50 = vadd.f32 %v42, %v48
    %s51 = sld [smem:[#allocation2 + $0x7]]
    %v52 = vstv %s51
    %v53 = vadd.f32 %v50, %v52
    %v54 = vmax.f32 %v53, 0.0
    %s55 = sld [smem:[#allocation2 + $0x2]]
    %v56 = vstv %s55
    %v57 = vmul.f32 %v24, %v56
    %s58 = sld [smem:[#allocation2 + $0x5]]
    %v59 = vstv %s58
    %v60 = vmul.f32 %v24, %v59
    %62 = vrot.lane.b32.xlu0 %v60, 127
    %v63 = vpop.permute.xlu0 %62
    %v65 = vadd.f32 %v57, %v63
    %s66 = sld [smem:[#allocation2 + $0x8]]
    %v67 = vstv %s66
    %v68 = vadd.f32 %v65, %v67
    %v69 = vmax.f32 %v68, 0.0
    %s70 = sld [smem:[#allocation2 + $0x9]]
    %v71 = vstv %s70
    %v72 = vmul.f32 %v39, %v71
    %s73 = sld [smem:[#allocation2 + $0xa]]
    %v74 = vstv %s73
    %v75 = vmul.f32 %v54, %v74
    %v76 = vadd.f32 %v72, %v75
    %s77 = sld [smem:[#allocation2 + $0xb]]
    %v78 = vstv %s77
    %v79 = vmul.f32 %v69, %v78
    %v80 = vadd.f32 %v76, %v79
    %s81 = sld [smem:[#allocation2 + $0xc]]
    %v82 = vstv %s81
    %v83 = vadd.f32 %v80, %v82
    %vm84 = vcmask 7168
    %85 = vst.msk [vmem:[%s2] sm:$0xff] %vm84, %v83
    // Predicated region
    $region14: #{simple_nn_forward.1} parent=1 // pred_check
      _
    $region15: #{simple_nn_forward.1} parent=1 // pred_check_branch
      %87 = sbr.rel (0) target = $region17
    $region16: #{simple_nn_forward.1} parent=1 // pred_region
      _
    $region17: #{simple_nn_forward.1} parent=1 // pred_fallthru
      _
    // Predicated region
    $region18: #{simple_nn_forward.1} parent=1 // pred_check
      _
    $region19: #{simple_nn_forward.1} parent=1 // pred_check_branch
      %89 = sbr.rel (0) target = $region21
    $region20: #{simple_nn_forward.1} parent=1 // pred_region
      _
    $region21: #{simple_nn_forward.1} parent=1 // pred_fallthru
      _
    %90 = vsyncpa [#allocation3], 1

</llo_original>
